<compile_context>
chip_gen: v5e
topology: v5e:2x2
jax: 0.10.0
libtpu: 0.0.40
codegen_flags: <defaults>
</compile_context>

<pallas_src>
import jax
import jax.numpy as jnp
from jax.experimental import pallas as pl
from jax.experimental.pallas import tpu as pltpu


def _se_mul_kernel(x_ref, se_ref, o_ref):
    # x_ref: (rt, ct); se_ref: (rt, 1) -> broadcast along the lane axis (VPU).
    o_ref[...] = x_ref[...] * se_ref[...]


def _tpu_generation():
    """Best-effort TPU generation (4/5/6/7) from the device-kind string."""
    try:
        kind = jax.devices()[0].device_kind.lower()
    except Exception:
        return None
    for gen in (7, 6, 5, 4):
        if f"v{gen}" in kind or f"tpu{gen}" in kind:
            return gen
    return None


def _tile_config():
    """Per-generation (row_tile, col_tile, vmem_cap_bytes, multi_tensorcore)."""
    gen = _tpu_generation()
    if gen == 7:
        # v7x: 64 MiB VMEM per TC, ~3.2 TB/s HBM, 2 TensorCores per chip.
        return 256, 4096, 48 << 20, True
    if gen == 6:
        # v6e: 128 MiB VMEM, ~1.3-1.4 TB/s HBM, single TC.
        return 256, 8192, 64 << 20, False
    if gen == 5:
        # v5e: 128 MiB VMEM (16 MiB scoped default), ~820 GB/s HBM, single TC.
        return 256, 2048, 32 << 20, False
    if gen == 4:
        # v4 megacore: two TCs; keep conservative tiles.
        return 256, 2048, 32 << 20, True
    # Unknown chip: conservative tiles, assume multiple TCs (split is cheap).
    return 256, 2048, 32 << 20, True


def _pick_tiles(rows, cols, row_tile, col_tile, want_two_steps):
    """Balanced (rt, ct) tile sizes; optionally force >=2 grid steps."""
    n_r = pl.cdiv(rows, row_tile)
    n_c = pl.cdiv(cols, col_tile)
    # On multi-TC chips make sure there are >=2 steps on a "parallel" axis so
    # the work can be sharded across TensorCores; ~0.35us extra elsewhere.
    if want_two_steps and n_r * n_c < 2:
        if cols >= 256:
            n_c = 2
        elif rows >= 16:
            n_r = 2
    # Balanced tiles avoid a near-empty, narrow masked trailing block.  A
    # block dim must be a multiple of (8 / 128) unless it is the full extent.
    rt = rows if n_r == 1 else 8 * pl.cdiv(rows, 8 * n_r)
    ct = cols if n_c == 1 else 128 * pl.cdiv(cols, 128 * n_c)
    return rt, ct


@jax.jit
def se_layer(x, x_se):
    """out = x * x_se  with x (B, C, H, W), x_se (B, C, 1, 1)."""
    B, C, H, W = x.shape
    assert x_se.shape == (B, C, 1, 1), f"expected (B,C,1,1) gate, got {x_se.shape}"

    rows = B * C
    cols = H * W

    if cols < 128:
        # Narrow-lane regime: <128 output lanes means masked vst.msk stores
        # and poor lane utilization; let XLA's fused broadcast-multiply handle
        # these small tensors instead.
        # TODO(synk): a lane-dense (N/128, 128) repack with an in-kernel
        # per-element channel gather could keep this in Pallas if these
        # shapes ever dominate runtime.
        return x * x_se.astype(x.dtype)

    row_tile, col_tile, vmem_cap, multi_tc = _tile_config()
    rt, ct = _pick_tiles(rows, cols, row_tile, col_tile, multi_tc)
    grid = (pl.cdiv(rows, rt), pl.cdiv(cols, ct))

    # Contiguous NCHW reshapes: metadata-only under jit.
    x2 = x.reshape(rows, cols)
    se2 = x_se.reshape(rows, 1).astype(x.dtype)

    itemsize = jnp.dtype(x.dtype).itemsize
    # Double-buffered x tile + out tile, plus the (rt, 1) gate block (pads to
    # (rt, 128) in VMEM), plus slack for Mosaic scratch; clamp to the
    # per-generation cap.
    vmem_bytes = 2 * (2 * rt * ct * itemsize + rt * 128 * itemsize) + (4 << 20)
    vmem_bytes = int(min(max(vmem_bytes, 16 << 20), vmem_cap))

    cost = pl.CostEstimate(
        flops=rows * cols,
        transcendentals=0,
        bytes_accessed=(2 * rows * cols + rows) * itemsize,
    )

    out2 = pl.pallas_call(
        _se_mul_kernel,
        out_shape=jax.ShapeDtypeStruct((rows, cols), x.dtype),
        grid_spec=pltpu.PrefetchScalarGridSpec(
            num_scalar_prefetch=0,
            # NOTE: keep the column axis innermost -- the gate block index
            # (i, 0) is then constant across the inner loop, so Pallas does
            # not re-DMA the (rt, 1) gate tile every column step.
            grid=grid,
            in_specs=[
                pl.BlockSpec((rt, ct), lambda i, j: (i, j)),
                pl.BlockSpec((rt, 1), lambda i, j: (i, 0)),
            ],
            out_specs=pl.BlockSpec((rt, ct), lambda i, j: (i, j)),
        ),
        compiler_params=pltpu.CompilerParams(
            dimension_semantics=("parallel", "parallel"),
            vmem_limit_bytes=vmem_bytes,
        ),
        cost_estimate=cost,
    )(x2, se2)

    return out2.reshape(B, C, H, W)


if __name__ == "__main__":
    # SELayer.__init__ defines no parameters used in forward; forward is x * x_se.
    key = jax.random.PRNGKey(0)
    keys = jax.random.split(key, 10)

    def check(x, se, atol=1e-6, rtol=1e-6):
        out = se_layer(x, se)
        jax.block_until_ready(out)
        ref = x * se
        assert out.shape == ref.shape, (out.shape, ref.shape)
        assert out.dtype == ref.dtype, (out.dtype, ref.dtype)
        assert jnp.allclose(out, ref, atol=atol, rtol=rtol)

    # Case 1: small canonical shape (Pallas path; may split into 2 column
    # blocks on multi-TC chips).
    x1 = jax.random.normal(keys[0], (2, 4, 16, 16), dtype=jnp.float32)
    s1 = jax.random.uniform(keys[1], (2, 4, 1, 1), dtype=jnp.float32)
    check(x1, s1)

    # Case 2: rows > row_tile with rows % 8 != 0 and cols % 128 != 0 ->
    # multiple balanced row blocks plus masked edge handling.
    x2 = jax.random.normal(keys[2], (3, 100, 12, 15), dtype=jnp.float32)
    s2 = jax.random.uniform(keys[3], (3, 100, 1, 1), dtype=jnp.float32)
    check(x2, s2)

    # Case 3: cols slightly above the v5e/default col_tile (2100 > 2048) ->
    # balanced column blocks instead of a narrow trailing sliver.
    x3 = jax.random.normal(keys[4], (2, 8, 30, 70), dtype=jnp.float32)
    s3 = jax.random.uniform(keys[5], (2, 8, 1, 1), dtype=jnp.float32)
    check(x3, s3)

    # Case 4: narrow-lane spatial size (7x7 = 49 < 128) -> XLA fallback path.
    x4 = jax.random.normal(keys[6], (3, 100, 7, 7), dtype=jnp.float32)
    s4 = jax.random.uniform(keys[7], (3, 100, 1, 1), dtype=jnp.float32)
    check(x4, s4)

    # Case 5: bf16 feature map / gate.
    x5 = jax.random.normal(keys[8], (2, 16, 16, 16), dtype=jnp.bfloat16)
    s5 = jax.random.uniform(keys[9], (2, 16, 1, 1), dtype=jnp.bfloat16)
    check(x5, s5, atol=1e-2, rtol=1e-2)

    print("KERNEL_OK")
</pallas_src>

<mosaic_0001>
module attributes {stable_mosaic.version = 11 : i64} {
  func.func @_se_mul_kernel(%arg0: i32, %arg1: i32, %arg2: memref<8x128xf32, #tpu.memory_space<vmem>>, %arg3: memref<8x1xf32, #tpu.memory_space<vmem>>, %arg4: memref<8x128xf32, #tpu.memory_space<vmem>>) attributes {dimension_semantics = [#tpu.dimension_semantics<parallel>, #tpu.dimension_semantics<parallel>], iteration_bounds = array<i64: 1, 2>, scalar_prefetch = 0 : i64, scratch_operands = 0 : i64, tpu.core_type = #tpu.core_type<tc>, window_params = [{transform_indices = @transform_0, window_bounds = array<i64: 8, 128>}, {transform_indices = @transform_1, window_bounds = array<i64: 8, 1>}, {transform_indices = @transform_2, window_bounds = array<i64: 8, 128>}]} {
    %c0 = arith.constant 0 : index
    %c0_0 = arith.constant 0 : index
    %0 = vector.load %arg2[%c0, %c0_0] : memref<8x128xf32, #tpu.memory_space<vmem>>, vector<8x128xf32>
    %c0_1 = arith.constant 0 : index
    %c0_2 = arith.constant 0 : index
    %1 = vector.load %arg3[%c0_1, %c0_2] : memref<8x1xf32, #tpu.memory_space<vmem>>, vector<8x1xf32>
    %2 = vector.broadcast %1 : vector<8x1xf32> to vector<8x128xf32>
    %3 = arith.mulf %0, %2 : vector<8x128xf32>
    %c0_3 = arith.constant 0 : index
    %c0_4 = arith.constant 0 : index
    %4 = vector.load %arg4[%c0_3, %c0_4] : memref<8x128xf32, #tpu.memory_space<vmem>>, vector<8x128xf32>
    tpu.vector_store %arg4[%c0_3, %c0_4], %3 {strides = array<i32>} : memref<8x128xf32, #tpu.memory_space<vmem>>, vector<8x128xf32>,
    return
  }
  func.func @transform_0(%arg0: i32, %arg1: i32) -> (i32, i32) {
    %c0_i32 = arith.constant 0 : i32
    return %arg0, %arg1 : i32, i32
  }
  func.func @transform_1(%arg0: i32, %arg1: i32) -> (i32, i32) {
    %c0_i32 = arith.constant 0 : i32
    %c0_i32_0 = arith.constant 0 : i32
    return %arg0, %c0_i32 : i32, i32
  }
  func.func @transform_2(%arg0: i32, %arg1: i32) -> (i32, i32) {
    %c0_i32 = arith.constant 0 : i32
    return %arg0, %arg1 : i32, i32
  }
}

</mosaic_0001>

<llo_original>
// kernel: se_layer.1
$region0: #{se_layer.1}
  #allocation0 [shape = 'u32[]', space=smem, size = 0x4, offset = 0x4, fixed_abs, tag = 'smem constant byte address 0x4 - core index']
  #allocation1 [shape = 'u32[72,128]{1,0:T(1,128)}', space=vmem, size = 0x9000, scoped, tag = 'internal scratch']
  %s0 = inlined_call_operand.vmem [shape: f32[8,256], index: 0, kind: input, shape index: {}]
  %s1 = inlined_call_operand.vmem [shape: f32[8,1], index: 1, kind: input, shape index: {}]
  %s2 = inlined_call_operand.vmem [shape: f32[8,256], index: 2, kind: output, shape index: {}]
  %s3 = sld [smem:[#allocation0]]
  $region41: #{se_layer.1} parent=0
    _
  %s5 = ssub.s32 1, %s3
  %s6 = scalar_select 0, %s5, %s3
  loop: start=0, step=1, limit=4
  $region2: #{se_layer.1} parent=0 // loop_pre_header
    _
  $region3: #{se_layer.1} parent=0 // loop_header
    %s8 = sphi 0, %s12
    %p9 = scmp.ge.s32.totalorder %s8, 4
    %s15 = sphi 0, %s27
    %s16 = sphi 0, %s23
    %s17 = sphi 0, %s15
    %s18 = sphi 0, %s16
    %s19 = sphi 0, %s17
    %s20 = sphi 0, %s18
    %s32 = sphi 0, %s34
    %s35 = sphi 0, %s32
    %s36 = sphi 0, %s35
    %s52 = sphi 0, %s36
    %s58 = sphi 0, %s60
    %s61 = sphi 0, %s58
    %s62 = sphi 0, %s61
    %s78 = sphi 0, %s62
    %s86 = sphi 0, %s88
    %s89 = sphi 0, %s86
    %s90 = sphi 0, %s89
    %s106 = sphi 0, %s90
  $region4: #{se_layer.1} parent=0 // loop_header_branch
    %11 = sbr.rel (%p9) target = $region8
  $region5: #{se_layer.1} parent=0 // loop_body
    %s13 = ssub.s32 %s8, 1
    %s14 = ssub.s32 %s8, 2
    %s21 = sadd.s32 1, %s16
    %p22 = scmp.ge.s32.totalorder %s21, 2
    %s23 = scalar_select %p22, 0, %s21
    %s24 = sadd.s32 1, %s15
    %s25 = scalar_select %p22, %s24, %s15
    %p26 = scmp.ge.s32.totalorder %s25, 1
    %s27 = scalar_select %p26, 0, %s25
    %s28 = ssub.s32 %s15, %s27
    %s29 = ssub.s32 %s16, %s23
    %s30 = sor.u32 %s28, %s29
    %p31 = scmp.eq.s32.totalorder %s30, 0
    %s33 = sadd.s32 %s32, 1
    %s34 = scalar_select %p31, %s32, %s33
    %p37 = pneg %p31
    %p38 = scmp.eq.s32.totalorder %s8, 1
    %p39 = por %p37, %p38
    %p40 = scmp.ne.s32.totalorder %s32, %s35
    %p41 = scmp.eq.s32.totalorder %s8, 0
    %p42 = por %p40, %p41
    %p43 = scmp.ne.s32.totalorder %s32, %s35
    %p44 = scmp.eq.s32.totalorder %s13, 1
    %p45 = por %p43, %p44
    %p46 = scmp.ne.s32.totalorder %s35, %s36
    %p47 = scmp.eq.s32.totalorder %s13, 0
    %p48 = por %p46, %p47
    %p49 = scmp.ne.s32.totalorder %s35, %s36
    %p50 = scmp.eq.s32.totalorder %s14, 1
    %p51 = por %p49, %p50
    %p53 = scmp.ne.s32.totalorder %s36, %s52
    %p54 = scmp.eq.s32.totalorder %s14, 0
    %p55 = por %p53, %p54
    %s56 = ssub.s32 %s15, %s27
    %p57 = scmp.eq.s32.totalorder %s56, 0
    %s59 = sadd.s32 %s58, 1
    %s60 = scalar_select %p57, %s58, %s59
    %p63 = pneg %p57
    %p64 = scmp.eq.s32.totalorder %s8, 1
    %p65 = por %p63, %p64
    %p66 = scmp.ne.s32.totalorder %s58, %s61
    %p67 = scmp.eq.s32.totalorder %s8, 0
    %p68 = por %p66, %p67
    %p69 = scmp.ne.s32.totalorder %s58, %s61
    %p70 = scmp.eq.s32.totalorder %s13, 1
    %p71 = por %p69, %p70
    %p72 = scmp.ne.s32.totalorder %s61, %s62
    %p73 = scmp.eq.s32.totalorder %s13, 0
    %p74 = por %p72, %p73
    %p75 = scmp.ne.s32.totalorder %s61, %s62
    %p76 = scmp.eq.s32.totalorder %s14, 1
    %p77 = por %p75, %p76
    %p79 = scmp.ne.s32.totalorder %s62, %s78
    %p80 = scmp.eq.s32.totalorder %s14, 0
    %p81 = por %p79, %p80
    %s82 = ssub.s32 %s15, %s27
    %s83 = ssub.s32 %s16, %s23
    %s84 = sor.u32 %s82, %s83
    %p85 = scmp.eq.s32.totalorder %s84, 0
    %s87 = sadd.s32 %s86, 1
    %s88 = scalar_select %p85, %s86, %s87
    %p91 = pneg %p85
    %p92 = scmp.eq.s32.totalorder %s8, 1
    %p93 = por %p91, %p92
    %p94 = scmp.ne.s32.totalorder %s86, %s89
    %p95 = scmp.eq.s32.totalorder %s8, 0
    %p96 = por %p94, %p95
    %p97 = scmp.ne.s32.totalorder %s86, %s89
    %p98 = scmp.eq.s32.totalorder %s13, 1
    %p99 = por %p97, %p98
    %p100 = scmp.ne.s32.totalorder %s89, %s90
    %p101 = scmp.eq.s32.totalorder %s13, 0
    %p102 = por %p100, %p101
    %p103 = scmp.ne.s32.totalorder %s89, %s90
    %p104 = scmp.eq.s32.totalorder %s14, 1
    %p105 = por %p103, %p104
    %p107 = scmp.ne.s32.totalorder %s90, %s106
    %p108 = scmp.eq.s32.totalorder %s14, 0
    %p109 = por %p107, %p108
    %p110 = scmp.le.s32.totalorder 1, %s8
    %p111 = scmp.lt.s32.totalorder %s8, 3
    %p112 = pnand %p110, %p111
    %p113 = pneg %p112
    // Predicated region
    $region9: #{se_layer.1} parent=5 // pred_check
      _
    $region10: #{se_layer.1} parent=5 // pred_check_branch
      %115 = sbr.rel (%p112) target = $region12
    $region11: #{se_layer.1} parent=5 // pred_region
      %s116 = ssub.s32 %s8, 1
      // Predicated region
      $region13: #{se_layer.1} parent=11 // pred_check
        %p117 = pneg %p74
      $region14: #{se_layer.1} parent=11 // pred_check_branch
        %119 = sbr.rel (%p117) target = $region16
      $region15: #{se_layer.1} parent=11 // pred_region
        %p120 = scmp.lt.s32.totalorder %s17, 0
        %s121 = scalar_select %p120, %s17, 0
        %s122 = smul.addr %s121, 8
        %s123 = scalar_lea.vmem %s1, %s122
      $region16: #{se_layer.1} parent=11 // pred_fallthru
        _
    $region12: #{se_layer.1} parent=5 // pred_fallthru
      _
    %p124 = scmp.lt.s32.totalorder %s8, 2
    // Predicated region
    $region17: #{se_layer.1} parent=5 // pred_check
      %p125 = pneg %p124
    $region18: #{se_layer.1} parent=5 // pred_check_branch
      %127 = sbr.rel (%p125) target = $region20
    $region19: #{se_layer.1} parent=5 // pred_region
      // Predicated region
      $region21: #{se_layer.1} parent=19 // pred_check
        %p128 = pneg %p42
      $region22: #{se_layer.1} parent=19 // pred_check_branch
        %130 = sbr.rel (%p128) target = $region24
      $region23: #{se_layer.1} parent=19 // pred_region
        %p131 = scmp.lt.s32.totalorder %s15, 0
        %s132 = scalar_select %p131, %s15, 0
        %p133 = scmp.lt.s32.totalorder %s16, 1
        %s134 = scalar_select %p133, %s16, 1
        %s135 = smul.addr %s132, 2
        %s136 = sadd.s32 %s134, %s135
        %s137 = smul.addr %s136, 8
        %s138 = scalar_lea.vmem %s0, %s137
      $region24: #{se_layer.1} parent=19 // pred_fallthru
        _
    $region20: #{se_layer.1} parent=5 // pred_fallthru
      _
    %p139 = scmp.le.s32.totalorder 1, %s8
    %p140 = scmp.lt.s32.totalorder %s8, 3
    %p141 = pnand %p139, %p140
    %p142 = pneg %p141
    // Predicated region
    $region25: #{se_layer.1} parent=5 // pred_check
      _
    $region26: #{se_layer.1} parent=5 // pred_check_branch
      %144 = sbr.rel (%p141) target = $region28
    $region27: #{se_layer.1} parent=5 // pred_region
      %s145 = ssub.s32 %s8, 1
      %p146 = scmp.lt.s32.totalorder %s17, 0
      %s147 = scalar_select %p146, %s17, 0
      %p148 = scmp.lt.s32.totalorder %s18, 1
      %s149 = scalar_select %p148, %s18, 1
      %s150 = smul.addr %s147, 2
      %s151 = sadd.s32 %s149, %s150
      %s152 = smul.addr %s151, 8
      %s153 = scalar_lea.vmem %s0, %s152
      %p154 = pneg %p48
      %p155 = pneg %p45
      %p156 = scmp.lt.s32.totalorder %s17, 0
      %s157 = scalar_select %p156, %s17, 0
      %s158 = smul.addr %s157, 8
      %s159 = scalar_lea.vmem %s1, %s158
      %p160 = pneg %p74
      %p161 = pneg %p71
      %p162 = pneg %p102
      %p163 = pneg %p99
      %p164 = scmp.lt.s32.totalorder %s17, 0
      %s165 = scalar_select %p164, %s17, 0
      %p166 = scmp.lt.s32.totalorder %s18, 1
      %s167 = scalar_select %p166, %s18, 1
      %s168 = smul.addr %s165, 2
      %s169 = sadd.s32 %s167, %s168
      %s170 = smul.addr %s169, 8
      %s171 = scalar_lea.vmem %s2, %s170
      %p172 = scmp.lt.s32.totalorder %s17, 0
      %s173 = scalar_select %p172, %s17, 0
      %p174 = scmp.lt.s32.totalorder %s18, 1
      %s175 = scalar_select %p174, %s18, 1
      %s176 = smul.addr %s173, 2
      %s177 = sadd.s32 %s175, %s176
      %s178 = smul.addr %s177, 8
      %s179 = scalar_lea.vmem %s0, %s178
      %p180 = scmp.lt.s32.totalorder %s17, 0
      %s181 = scalar_select %p180, %s17, 0
      %s182 = smul.addr %s181, 8
      %s183 = scalar_lea.vmem %s1, %s182
      %p184 = scmp.lt.s32.totalorder %s17, 0
      %s185 = scalar_select %p184, %s17, 0
      %p186 = scmp.lt.s32.totalorder %s18, 1
      %s187 = scalar_select %p186, %s18, 1
      %s188 = smul.addr %s185, 2
      %s189 = sadd.s32 %s187, %s188
      %s190 = smul.addr %s189, 8
      %s191 = scalar_lea.vmem %s2, %s190
      %v192 = vld [vmem:[%s179] sm:$0xff]
      %v193 = vld [vmem:[%s183] sm:$0xff]
      %195 = vset.pattern.permute.xlu0 0
      %196 = vperm.xlu0 %195, %v193
      %v197 = vpop.permute.xlu0 %196
      %v199 = vmul.f32 %v192, %v197
      %200 = vst [vmem:[%s191] sm:$0xff] %v199
      %p201 = scmp.lt.s32.totalorder %s17, 0
      %s202 = scalar_select %p201, %s17, 0
      %p203 = scmp.lt.s32.totalorder %s18, 1
      %s204 = scalar_select %p203, %s18, 1
      %s205 = smul.addr %s202, 2
      %s206 = sadd.s32 %s204, %s205
      %s207 = smul.addr %s206, 8
      %s208 = scalar_lea.vmem %s2, %s207
      // Predicated region
      $region29: #{se_layer.1} parent=27 // pred_check
        %p209 = pneg %p99
      $region30: #{se_layer.1} parent=27 // pred_check_branch
        %211 = sbr.rel (%p209) target = $region32
      $region31: #{se_layer.1} parent=27 // pred_region
        _
      $region32: #{se_layer.1} parent=27 // pred_fallthru
        _
    $region28: #{se_layer.1} parent=5 // pred_fallthru
      _
    %p212 = scmp.le.s32.totalorder 2, %s8
    // Predicated region
    $region33: #{se_layer.1} parent=5 // pred_check
      %p213 = pneg %p212
    $region34: #{se_layer.1} parent=5 // pred_check_branch
      %215 = sbr.rel (%p213) target = $region36
    $region35: #{se_layer.1} parent=5 // pred_region
      %s216 = ssub.s32 %s8, 2
      // Predicated region
      $region37: #{se_layer.1} parent=35 // pred_check
        %p217 = pneg %p105
      $region38: #{se_layer.1} parent=35 // pred_check_branch
        %219 = sbr.rel (%p217) target = $region40
      $region39: #{se_layer.1} parent=35 // pred_region
        %p220 = scmp.lt.s32.totalorder %s19, 0
        %s221 = scalar_select %p220, %s19, 0
        %p222 = scmp.lt.s32.totalorder %s20, 1
        %s223 = scalar_select %p222, %s20, 1
        %s224 = smul.addr %s221, 2
        %s225 = sadd.s32 %s223, %s224
        %s226 = smul.addr %s225, 8
        %s227 = scalar_lea.vmem %s2, %s226
      $region40: #{se_layer.1} parent=35 // pred_fallthru
        _
    $region36: #{se_layer.1} parent=5 // pred_fallthru
      _
  $region6: #{se_layer.1} parent=0 // loop_footer
    %s12 = sadd.s32 1, %s8
  $region7: #{se_layer.1} parent=0 // loop_footer_branch
    %7 = sbr.rel target = $region3
  $region8: #{se_layer.1} parent=0 // loop_exit
    _

</llo_original>
